<compile_context>
chip_gen: v5e
topology: v5e:2x2
jax: 0.10.0
libtpu: 0.0.40
codegen_flags: <defaults>
</compile_context>

<pallas_src>
import functools

import numpy as np
import jax
import jax.numpy as jnp
from jax import lax
from jax.experimental import pallas as pl
from jax.experimental.pallas import tpu as pltpu

EPSILON = 1e-8  # stand-in for constant.EPSILON


def s3_quadrature_weights(b):
    """SOFT-grid quadrature weights, deterministic numpy stand-in for lie_learn S3."""
    # TODO(synk): normalization follows lie_learn.spaces.S3 (SOFT grid); swap in the real
    # S3.quadrature_weights if bit-exact parity with the torch reference is required.
    j = np.arange(2 * b, dtype=np.float64)
    k = np.arange(b, dtype=np.float64)
    inner = np.sum(
        (1.0 / (2.0 * k + 1.0))[None, :]
        * np.sin((2.0 * j[:, None] + 1.0) * (2.0 * k[None, :] + 1.0) * np.pi / (4.0 * b)),
        axis=1,
    )
    w = (2.0 / b) * np.sin(np.pi * (2.0 * j + 1.0) / (4.0 * b)) * inner
    w *= np.pi / (2.0 * (2.0 * b) ** 2)
    return w.astype(np.float32)


def _cdiv(a, b):
    return -(-a // b)


# ------------- fused  -log(x+eps)*target  ->  quadrature integrate  ->  mean -------------
def _nll_integrate_kernel(out_ref, tgt_ref, w_ref, loss_ref, acc_ref, *,
                          eps, inv_count, tm, tiles_per_core, m_valid, need_mask):
    # out/tgt: (tm, L) row tile in native dtype, L = 2b*2b lane-dense
    # w:       (1, L)  quadrature weight per lane (w[beta] repeated along alpha), f32
    # loss:    (1,1,1) per-core partial result; acc: (1, L) f32 per-lane accumulator
    i = pl.program_id(1)

    @pl.when(i == 0)
    def _init():
        acc_ref[...] = jnp.zeros_like(acc_ref)

    x = out_ref[...].astype(jnp.float32)          # in-vreg upcast (free VPU filler)
    t = tgt_ref[...].astype(jnp.float32)

    if need_mask:                                  # static: only traced when tiles are ragged
        c = pl.program_id(0)
        row = lax.broadcasted_iota(jnp.int32, (tm, 1), 0)
        global_row = (c * tiles_per_core + i) * tm + row
        valid = global_row < m_valid
        x = jnp.where(valid, x, 1.0)               # keep log() finite on padded/garbage rows
        t = jnp.where(valid, t, 0.0)               # and zero their contribution

    nll = -jnp.log(x + eps) * t                    # EUP log + VPU mul
    # per-lane partial sums only: no cross-lane reduce, no weight multiply per step
    acc_ref[...] += jnp.sum(nll, axis=0, keepdims=True)

    @pl.when(i == tiles_per_core - 1)
    def _finalize():
        weighted = acc_ref[...] * w_ref[...]                       # quadrature weights, once
        total = jnp.sum(weighted, keepdims=True) * inv_count       # (1,1) scalar partial
        loss_ref[...] = jnp.reshape(total, (1, 1, 1))


def neg_log_likely_hood(output, target):
    """Pallas implementation of neg_log_likely_hood.forward(output, target) -> scalar."""
    assert output.shape == target.shape and output.ndim >= 2
    *lead, two_b, last = output.shape
    b = two_b // 2
    assert two_b == 2 * b and b >= 1

    mean_count = int(np.prod(lead)) if lead else 1   # elements averaged over (torch .mean())
    M = mean_count                                   # rows
    L = two_b * last                                 # integrated dims flattened onto lanes

    # quadrature weight per flattened (beta, alpha) lane: w[beta] repeated along alpha
    w = s3_quadrature_weights(b)                     # (2b,)
    w_lane = np.repeat(w, last)                      # (L,)

    # ---- lane-density guard: fold leading elements into lanes if L < 128 ----
    fold = 1
    if L < 128 and M > 1:
        for f in range(2, min(M, 4096) + 1):
            if M % f == 0 and (L * f >= 128 or f == M):
                fold = f
                break
    if fold > 1:
        M //= fold
        L *= fold
        w_lane = np.tile(w_lane, fold)

    # keep native dtype (e.g. bf16) end-to-end; only non-float inputs get cast
    if not jnp.issubdtype(output.dtype, jnp.floating):
        output = output.astype(jnp.float32)
    if not jnp.issubdtype(target.dtype, jnp.floating):
        target = target.astype(jnp.float32)

    out2d = output.reshape(M, L)
    tgt2d = target.reshape(M, L)
    w_row = jnp.asarray(w_lane, jnp.float32).reshape(1, L)

    # ---- VMEM sizing: big tiles, but the same code must stay inside v7x's 64 MiB VMEM ----
    try:
        vmem_phys = int(pltpu.get_tpu_info().vmem_capacity_bytes)
    except Exception:
        vmem_phys = 64 * 1024 * 1024                 # v7x-safe fallback
    vmem_limit = min(52 * 1024 * 1024, int(vmem_phys * 4 // 5))   # query only ever lowers it
    vmem_limit = max(vmem_limit, 16 * 1024 * 1024)
    input_budget = max(4 * 1024 * 1024, vmem_limit - 12 * 1024 * 1024)

    NCORES_MAX = 2                                   # both TensorCores on v7x; serial on v5e/v6e
    bytes_per_row = L * (out2d.dtype.itemsize + tgt2d.dtype.itemsize)
    max_rows = max(8, input_budget // (2 * bytes_per_row))        # x2: double buffering
    min_item = min(out2d.dtype.itemsize, tgt2d.dtype.itemsize)
    row_align = {4: 8, 2: 16, 1: 32}.get(min_item, 8)             # sublane packing per dtype

    tm = min(max_rows, _cdiv(M, NCORES_MAX))
    tm = max(row_align, (tm // row_align) * row_align)
    if tm >= M:
        tm = M                                       # full extent: always a legal block
    real_tiles = _cdiv(M, tm)
    ncores = NCORES_MAX if real_tiles >= NCORES_MAX else 1
    tiles_per_core = _cdiv(real_tiles, ncores)
    need_mask = (ncores * tiles_per_core * tm) != M  # ragged tail / duplicated clamped blocks
    last_block = real_tiles - 1

    def row_map(c, i):
        # clamp so a core with fewer real tiles re-reads a valid block (fully masked out)
        return (jnp.minimum(c * tiles_per_core + i, last_block), 0)

    kernel = functools.partial(
        _nll_integrate_kernel,
        eps=float(EPSILON),
        inv_count=1.0 / float(mean_count),
        tm=tm,
        tiles_per_core=tiles_per_core,
        m_valid=M,
        need_mask=need_mask,
    )

    n_elem = M * L
    cost = pl.CostEstimate(
        flops=4 * n_elem,
        transcendentals=n_elem,
        bytes_accessed=n_elem * (out2d.dtype.itemsize + tgt2d.dtype.itemsize) + L * 4 + ncores * 4,
    )

    partials = pl.pallas_call(
        kernel,
        out_shape=jax.ShapeDtypeStruct((ncores, 1, 1), jnp.float32),
        grid=(ncores, tiles_per_core),
        in_specs=[
            pl.BlockSpec((tm, L), row_map),                 # output rows (pipelined)
            pl.BlockSpec((tm, L), row_map),                 # target rows (pipelined)
            pl.BlockSpec((1, L), lambda c, i: (0, 0)),      # weight row, constant index
        ],
        out_specs=pl.BlockSpec((1, 1, 1), lambda c, i: (c, 0, 0)),
        scratch_shapes=[pltpu.VMEM((1, L), jnp.float32)],   # per-lane f32 accumulator
        compiler_params=pltpu.CompilerParams(
            dimension_semantics=("parallel", "arbitrary"),  # cores x sequential row reduction
            vmem_limit_bytes=int(vmem_limit),
        ),
        cost_estimate=cost,
    )(out2d, tgt2d, w_row)

    return jnp.sum(partials)     # sum per-core partial means -> scalar loss


# ---------------- pure-JAX reference (mirrors the torch module) ----------------
def _reference(output, target, eps):
    b = output.shape[-2] // 2
    w = jnp.asarray(s3_quadrature_weights(b), jnp.float32)
    loss = -jnp.log(output.astype(jnp.float32) + eps) * target.astype(jnp.float32)
    loss = jnp.sum(loss, axis=-1)                   # sum over last dim
    loss = jnp.einsum("...k,k->...", loss, w)       # quadrature weights along dim -2
    return jnp.mean(loss)


if __name__ == "__main__":
    key = jax.random.PRNGKey(0)
    k1, k2 = jax.random.split(key)

    # (batch=2, channels=4, 2b=16, 2b=16): a signal on the b=8 S2/SO(3) SOFT grid
    B, C, bw = 2, 4, 8
    shape = (B, C, 2 * bw, 2 * bw)
    output = jax.random.uniform(k1, shape, jnp.float32, 0.05, 1.0)   # positive "likelihoods"
    target = jax.random.uniform(k2, shape, jnp.float32, 0.0, 1.0)

    loss = jax.jit(neg_log_likely_hood)(output, target)
    loss = jax.block_until_ready(loss)

    ref = _reference(output, target, EPSILON)
    assert loss.shape == (), loss.shape
    assert bool(jnp.isfinite(loss)), loss
    assert bool(jnp.allclose(loss, ref, rtol=1e-4, atol=1e-6)), (loss, ref)
    print("KERNEL_OK")
</pallas_src>

<mosaic_0001>
module attributes {stable_mosaic.version = 11 : i64} {
  func.func @_nll_integrate_kernel(%arg0: i32, %arg1: i32, %arg2: memref<8x256xf32, #tpu.memory_space<vmem>>, %arg3: memref<8x256xf32, #tpu.memory_space<vmem>>, %arg4: memref<1x256xf32, #tpu.memory_space<vmem>>, %arg5: memref<1x1x1xf32, #tpu.memory_space<vmem>>, %arg6: memref<1x256xf32, #tpu.memory_space<vmem>>) attributes {dimension_semantics = [#tpu.dimension_semantics<parallel>, #tpu.dimension_semantics<arbitrary>], iteration_bounds = array<i64: 1, 1>, scalar_prefetch = 0 : i64, scratch_operands = 1 : i64, tpu.core_type = #tpu.core_type<tc>, window_params = [{transform_indices = @transform_0, window_bounds = array<i64: 8, 256>}, {transform_indices = @transform_1, window_bounds = array<i64: 8, 256>}, {pipeline_mode = #tpu.pipeline_mode<synchronous>, transform_indices = @transform_2, window_bounds = array<i64: 1, 256>}, {transform_indices = @transform_3, window_bounds = array<i64: 1, 1, 1>}]} {
    %c0_i32 = arith.constant 0 : i32
    %0 = arith.cmpi eq, %arg1, %c0_i32 : i32
    %1 = arith.extui %0 : i1 to i32
    %c0_i32_0 = arith.constant 0 : i32
    %2 = arith.cmpi ne, %1, %c0_i32_0 : i32
    scf.if %2 {
      %cst_12 = arith.constant 0.000000e+00 : f32
      %19 = vector.broadcast %cst_12 : f32 to vector<1x256xf32>
      %c0_13 = arith.constant 0 : index
      %c0_14 = arith.constant 0 : index
      %20 = vector.load %arg6[%c0_13, %c0_14] : memref<1x256xf32, #tpu.memory_space<vmem>>, vector<1x256xf32>
      tpu.vector_store %arg6[%c0_13, %c0_14], %19 {strides = array<i32>} : memref<1x256xf32, #tpu.memory_space<vmem>>, vector<1x256xf32>,
    } else {
    }
    %c0 = arith.constant 0 : index
    %c0_1 = arith.constant 0 : index
    %3 = vector.load %arg2[%c0, %c0_1] : memref<8x256xf32, #tpu.memory_space<vmem>>, vector<8x256xf32>
    %c0_2 = arith.constant 0 : index
    %c0_3 = arith.constant 0 : index
    %4 = vector.load %arg3[%c0_2, %c0_3] : memref<8x256xf32, #tpu.memory_space<vmem>>, vector<8x256xf32>
    %cst = arith.constant 9.99999993E-9 : f32
    %5 = vector.broadcast %cst : f32 to vector<8x256xf32>
    %6 = arith.addf %3, %5 : vector<8x256xf32>
    %7 = math.log %6 : vector<8x256xf32>
    %cst_4 = arith.constant 0.000000e+00 : f32
    %8 = vector.broadcast %cst_4 : f32 to vector<8x256xf32>
    %9 = arith.subf %8, %7 : vector<8x256xf32>
    %10 = arith.mulf %9, %4 : vector<8x256xf32>
    %c0_5 = arith.constant 0 : index
    %c0_6 = arith.constant 0 : index
    %11 = vector.load %arg6[%c0_5, %c0_6] : memref<1x256xf32, #tpu.memory_space<vmem>>, vector<1x256xf32>
    %cst_7 = arith.constant dense<0.000000e+00> : vector<256xf32>
    %12 = vector.multi_reduction <add>, %10, %cst_7 [0] : vector<8x256xf32> to vector<256xf32>
    %13 = vector.shape_cast %12 : vector<256xf32> to vector<1x256xf32>
    %14 = arith.addf %11, %13 : vector<1x256xf32>
    %c0_8 = arith.constant 0 : index
    %c0_9 = arith.constant 0 : index
    %15 = vector.load %arg6[%c0_8, %c0_9] : memref<1x256xf32, #tpu.memory_space<vmem>>, vector<1x256xf32>
    tpu.vector_store %arg6[%c0_8, %c0_9], %14 {strides = array<i32>} : memref<1x256xf32, #tpu.memory_space<vmem>>, vector<1x256xf32>,
    %c0_i32_10 = arith.constant 0 : i32
    %16 = arith.cmpi eq, %arg1, %c0_i32_10 : i32
    %17 = arith.extui %16 : i1 to i32
    %c0_i32_11 = arith.constant 0 : i32
    %18 = arith.cmpi ne, %17, %c0_i32_11 : i32
    scf.if %18 {
      %c0_12 = arith.constant 0 : index
      %c0_13 = arith.constant 0 : index
      %19 = vector.load %arg6[%c0_12, %c0_13] : memref<1x256xf32, #tpu.memory_space<vmem>>, vector<1x256xf32>
      %c0_14 = arith.constant 0 : index
      %c0_15 = arith.constant 0 : index
      %20 = vector.load %arg4[%c0_14, %c0_15] : memref<1x256xf32, #tpu.memory_space<vmem>>, vector<1x256xf32>
      %21 = arith.mulf %19, %20 : vector<1x256xf32>
      %22 = vector.shape_cast %21 : vector<1x256xf32> to vector<1x1x256xf32>
      %cst_16 = arith.constant dense<0.000000e+00> : vector<1xf32>
      %23 = vector.multi_reduction <add>, %22, %cst_16 [1, 2] : vector<1x1x256xf32> to vector<1xf32>
      %24 = vector.shape_cast %23 : vector<1xf32> to vector<1x1x1xf32>
      %25 = vector.extract %24[0, 0, 0] : f32 from vector<1x1x1xf32>
      %26 = vector.broadcast %25 : f32 to vector<1x1xf32>
      %cst_17 = arith.constant 1.250000e-01 : f32
      %27 = vector.broadcast %cst_17 : f32 to vector<1x1xf32>
      %28 = arith.mulf %26, %27 : vector<1x1xf32>
      %29 = vector.shape_cast %28 : vector<1x1xf32> to vector<1x1x1xf32>
      %c0_18 = arith.constant 0 : index
      %c0_19 = arith.constant 0 : index
      %c0_20 = arith.constant 0 : index
      %30 = vector.load %arg5[%c0_18, %c0_19, %c0_20] : memref<1x1x1xf32, #tpu.memory_space<vmem>>, vector<1x1x1xf32>
      tpu.vector_store %arg5[%c0_18, %c0_19, %c0_20], %29 {strides = array<i32>} : memref<1x1x1xf32, #tpu.memory_space<vmem>>, vector<1x1x1xf32>,
    } else {
    }
    return
  }
  func.func @transform_0(%arg0: i32, %arg1: i32) -> (i32, i32) {
    %c1_i32 = arith.constant 1 : i32
    %0 = arith.muli %arg0, %c1_i32 : i32
    %1 = arith.addi %0, %arg1 : i32
    %c0_i32 = arith.constant 0 : i32
    %2 = arith.minsi %1, %c0_i32 : i32
    %c0_i32_0 = arith.constant 0 : i32
    %c0_i32_1 = arith.constant 0 : i32
    return %2, %c0_i32_0 : i32, i32
  }
  func.func @transform_1(%arg0: i32, %arg1: i32) -> (i32, i32) {
    %c1_i32 = arith.constant 1 : i32
    %0 = arith.muli %arg0, %c1_i32 : i32
    %1 = arith.addi %0, %arg1 : i32
    %c0_i32 = arith.constant 0 : i32
    %2 = arith.minsi %1, %c0_i32 : i32
    %c0_i32_0 = arith.constant 0 : i32
    %c0_i32_1 = arith.constant 0 : i32
    return %2, %c0_i32_0 : i32, i32
  }
  func.func @transform_2(%arg0: i32, %arg1: i32) -> (i32, i32) {
    %c0_i32 = arith.constant 0 : i32
    %c0_i32_0 = arith.constant 0 : i32
    %c0_i32_1 = arith.constant 0 : i32
    return %c0_i32, %c0_i32_0 : i32, i32
  }
  func.func @transform_3(%arg0: i32, %arg1: i32) -> (i32, i32, i32) {
    %c0_i32 = arith.constant 0 : i32
    %c0_i32_0 = arith.constant 0 : i32
    %c0_i32_1 = arith.constant 0 : i32
    return %arg0, %c0_i32, %c0_i32_0 : i32, i32, i32
  }
}

</mosaic_0001>

<llo_original>
// kernel: neg_log_likely_hood.1
$region0: #{neg_log_likely_hood.1}
  #allocation0 [shape = 'u32[]', space=smem, size = 0x4, offset = 0x4, fixed_abs, tag = 'smem constant byte address 0x4 - core index']
  #allocation1 [shape = 'u32[72,128]{1,0:T(1,128)}', space=vmem, size = 0x9000, scoped, tag = 'internal scratch']
  #allocation2 [shape = 'f32[1,256]{1,0:T(1,128)}', space=vmem, size = 0x400, scoped, tag = 'scratch operand']
  %s0 = inlined_call_operand.vmem [shape: f32[8,256], index: 0, kind: input, shape index: {}]
  %s1 = inlined_call_operand.vmem [shape: f32[8,256], index: 1, kind: input, shape index: {}]
  %s2 = inlined_call_operand.vmem [shape: f32[1,256], index: 2, kind: input, shape index: {}]
  %s3 = inlined_call_operand.hbm [shape: f32[1,1,1], index: 3, kind: output, shape index: {}]
  %s4 = sld [smem:[#allocation0]]
  $region30: #{neg_log_likely_hood.1} parent=0
    _
  %s6 = ssub.s32 1, %s4
  %s7 = scalar_select 0, %s6, %s4
  $region1: #{neg_log_likely_hood.1} parent=0
    #allocation3 [shape = 'u8[512]{0}', space=vmem, size = 0x400, scoped, tag = 'output window, operand 0, single buffered']
    #allocation4 [shape = 's32[1]{0}', space=sflag, size = 0x4, scoped, tag = 'scoped memory for neg_log_likely_hood.1']
    %8 = vsyncpa [#allocation4], 0
    // Predicated region
    $region2: #{neg_log_likely_hood.1} parent=1 // pred_check
      _
    $region3: #{neg_log_likely_hood.1} parent=1 // pred_check_branch
      %10 = sbr.rel (0) target = $region5
    $region4: #{neg_log_likely_hood.1} parent=1 // pred_region
      %s11 = sadd.s32 0, 0
      %p12 = scmp.lt.s32.totalorder %s11, 0
      %s13 = scalar_select %p12, %s11, 0
      %p14 = scmp.lt.s32.totalorder %s13, 0
      %s15 = scalar_select %p14, %s13, 0
      %s16 = smul.addr %s15, 2
      %s17 = smul.addr %s16, 8
      %s18 = scalar_lea.vmem %s0, %s17
      %s19 = sadd.s32 0, 0
      %p20 = scmp.lt.s32.totalorder %s19, 0
      %s21 = scalar_select %p20, %s19, 0
    $region5: #{neg_log_likely_hood.1} parent=1 // pred_fallthru
      _
    // Predicated region
    $region6: #{neg_log_likely_hood.1} parent=1 // pred_check
      _
    $region7: #{neg_log_likely_hood.1} parent=1 // pred_check_branch
      %23 = sbr.rel (0) target = $region9
    $region8: #{neg_log_likely_hood.1} parent=1 // pred_region
      %s24 = sadd.s32 0, 0
      %p25 = scmp.lt.s32.totalorder %s24, 0
      %s26 = scalar_select %p25, %s24, 0
      %p27 = scmp.lt.s32.totalorder %s26, 0
      %s28 = scalar_select %p27, %s26, 0
      %s29 = smul.addr %s28, 2
      %s30 = smul.addr %s29, 8
      %s31 = scalar_lea.vmem %s1, %s30
      %s32 = sadd.s32 0, 0
      %p33 = scmp.lt.s32.totalorder %s32, 0
      %s34 = scalar_select %p33, %s32, 0
    $region9: #{neg_log_likely_hood.1} parent=1 // pred_fallthru
      _
    // Predicated region
    $region10: #{neg_log_likely_hood.1} parent=1 // pred_check
      _
    $region11: #{neg_log_likely_hood.1} parent=1 // pred_check_branch
      %36 = sbr.rel (0) target = $region13
    $region12: #{neg_log_likely_hood.1} parent=1 // pred_region
      _
    $region13: #{neg_log_likely_hood.1} parent=1 // pred_fallthru
      _
    %s37 = sadd.s32 0, 0
    %p38 = scmp.lt.s32.totalorder %s37, 0
    %s39 = scalar_select %p38, %s37, 0
    %p40 = scmp.lt.s32.totalorder %s39, 0
    %s41 = scalar_select %p40, %s39, 0
    %s42 = smul.addr %s41, 2
    %s43 = smul.addr %s42, 8
    %s44 = scalar_lea.vmem %s0, %s43
    %s45 = sadd.s32 0, 0
    %p46 = scmp.lt.s32.totalorder %s45, 0
    %s47 = scalar_select %p46, %s45, 0
    %p48 = scmp.lt.s32.totalorder %s47, 0
    %s49 = scalar_select %p48, %s47, 0
    %s50 = smul.addr %s49, 2
    %s51 = smul.addr %s50, 8
    %s52 = scalar_lea.vmem %s1, %s51
    %s53 = sadd.s32 0, 0
    %p54 = scmp.lt.s32.totalorder %s53, 0
    %s55 = scalar_select %p54, %s53, 0
    %p56 = scmp.lt.s32.totalorder %s55, 0
    %s57 = scalar_select %p56, %s55, 0
    %s58 = smul.addr %s57, 2
    %s59 = smul.addr %s58, 8
    %s60 = scalar_lea.vmem %s0, %s59
    %s61 = sadd.s32 0, 0
    %p62 = scmp.lt.s32.totalorder %s61, 0
    %s63 = scalar_select %p62, %s61, 0
    %s64 = sadd.s32 0, 0
    %p65 = scmp.lt.s32.totalorder %s64, 0
    %s66 = scalar_select %p65, %s64, 0
    %p67 = scmp.lt.s32.totalorder %s66, 0
    %s68 = scalar_select %p67, %s66, 0
    %s69 = smul.addr %s68, 2
    %s70 = smul.addr %s69, 8
    %s71 = scalar_lea.vmem %s1, %s70
    %s72 = sadd.s32 0, 0
    %p73 = scmp.lt.s32.totalorder %s72, 0
    %s74 = scalar_select %p73, %s72, 0
    %p75 = scmp.eq.s32.totalorder 0, 0
    // Predicated region
    $region14: #{neg_log_likely_hood.1} parent=1 // pred_check
      %p76 = pneg %p75
    $region15: #{neg_log_likely_hood.1} parent=1 // pred_check_branch
      %78 = sbr.rel (%p76) target = $region17
    $region16: #{neg_log_likely_hood.1} parent=1 // pred_region
      %v79 = vlaneseq
      %vm80 = vcmp.ge.s32.totalorder %v79, 0
      %vm81 = vcmp.lt.s32.totalorder %v79, 256
      %vm82 = vmand %vm80, %vm81
      %83 = vst.msk [vmem:[#allocation2] sm:$0x3] %vm82, 0.0
    $region17: #{neg_log_likely_hood.1} parent=1 // pred_fallthru
      _
    %v84 = vld [vmem:[%s60] sm:$0xff]
    %v85 = vld [vmem:[%s60 + $0x8] sm:$0xff]
    %v86 = vld [vmem:[%s71] sm:$0xff]
    %v87 = vld [vmem:[%s71 + $0x8] sm:$0xff]
    %v88 = vadd.f32 %v84, 1e-08
    %v89 = vadd.f32 %v85, 1e-08
    %v90 = vlog2.pop %v88
    %v91 = vmul.f32 %v90, 0.6931472
    %v92 = vlog2.pop %v89
    %v93 = vmul.f32 %v92, 0.6931472
    %v94 = vsub.f32 0.0, %v91
    %v95 = vsub.f32 0.0, %v93
    %v96 = vmul.f32 %v94, %v86
    %v97 = vmul.f32 %v95, %v87
    %v98 = vld [vmem:[#allocation2] sm:$0x3]
    %v99 = vrot.slane %v96, 4
    %v100 = vadd.f32 %v96, %v99
    %v101 = vrot.slane %v100, 2
    %v102 = vadd.f32 %v100, %v101
    %v103 = vrot.slane %v102, 1
    %v104 = vadd.f32 %v102, %v103
    %v105 = vrot.slane %v97, 4
    %v106 = vadd.f32 %v97, %v105
    %v107 = vrot.slane %v106, 2
    %v108 = vadd.f32 %v106, %v107
    %v109 = vrot.slane %v108, 1
    %v110 = vadd.f32 %v108, %v109
    %v113 = vrot.slane %v110, 7
    %vm114 = vcmask 1040384
    %v115 = vsel %vm114, %v104, %v113
    %v117 = vadd.f32 %v98, %v115
    %v118 = vlaneseq
    %vm119 = vcmp.ge.s32.totalorder %v118, 0
    %vm120 = vcmp.lt.s32.totalorder %v118, 256
    %vm121 = vmand %vm119, %vm120
    %122 = vst.msk [vmem:[#allocation2] sm:$0x3] %vm121, %v117
    // Predicated region
    $region18: #{neg_log_likely_hood.1} parent=1 // pred_check
      %p123 = pneg %p75
    $region19: #{neg_log_likely_hood.1} parent=1 // pred_check_branch
      %125 = sbr.rel (%p123) target = $region21
    $region20: #{neg_log_likely_hood.1} parent=1 // pred_region
      %v126 = vld [vmem:[#allocation2] sm:$0x3]
      %v127 = vld [vmem:[%s2] sm:$0x3]
      %v128 = vmul.f32 %v126, %v127
      %v130 = vperm.slane %v128, 0
      %v131 = vperm.slane %v128, 1
      %v134 = vsel %vm114, %v130, 0.0
      %v135 = vsel %vm114, %v131, 0.0
      %v136 = vadd.f32 %v134, %v135
      %137 = vadd.xlane.f32.xlu0 %v136
      %v138 = vpop.xlane.xlu0 %137
      %v139 = vrot.slane %v138, 4
      %v140 = vadd.f32 %v138, %v139
      %v141 = vrot.slane %v140, 2
      %v142 = vadd.f32 %v140, %v141
      %v143 = vrot.slane %v142, 1
      %v144 = vadd.f32 %v142, %v143
      %s145 = vtos %v144
      %v146 = vstv %s145
      %v147 = vmul.f32 %v146, 0.125
      %vm148 = vcmask 0
      %149 = vst.msk [vmem:[#allocation3] sm:$0x1] %vm148, %v147
    $region21: #{neg_log_likely_hood.1} parent=1 // pred_fallthru
      _
    // Predicated region
    $region22: #{neg_log_likely_hood.1} parent=1 // pred_check
      _
    $region23: #{neg_log_likely_hood.1} parent=1 // pred_check_branch
      %151 = sbr.rel (0) target = $region25
    $region24: #{neg_log_likely_hood.1} parent=1 // pred_region
      %153 = vsyncadd [#allocation4], 0
      %s155 = sshll.u32 [#allocation3], 4
      %s156 = int_to_ptr.vmem [resolvable:$true] %s155
      %s157 = sshll.u32 %s3, 4
      %s158 = int_to_ptr.hbm [resolvable:$true] %s157
      %160 = dma.vmem_to_hbm [thread:$0]  %s156, 16, %s158, [#allocation4]
    $region25: #{neg_log_likely_hood.1} parent=1 // pred_fallthru
      _
    // Predicated region
    $region26: #{neg_log_likely_hood.1} parent=1 // pred_check
      _
    $region27: #{neg_log_likely_hood.1} parent=1 // pred_check_branch
      %162 = sbr.rel (0) target = $region29
    $region28: #{neg_log_likely_hood.1} parent=1 // pred_region
      %164 = dma.done [#allocation4], 16
    $region29: #{neg_log_likely_hood.1} parent=1 // pred_fallthru
      _
    %165 = vsyncpa [#allocation4], 1

</llo_original>
